<compile_context>
chip_gen: v7x
topology: tpu7x:2x2x1
jax: 0.10.0
libtpu: 0.0.40
codegen_flags: <defaults>
</compile_context>

<pallas_src>
import functools
import math

import jax
import jax.numpy as jnp
from jax.experimental import pallas as pl
from jax.experimental.pallas import tpu as pltpu


def _vmem_budget():
    """Return (target combined in+out padded block bytes per grid step,
    declared vmem_limit_bytes), adapted to the chip generation."""
    try:
        phys = pltpu.get_tpu_info().vmem_capacity_bytes
    except Exception:  # be conservative (v7x has only 64 MiB per TensorCore)
        phys = 64 * 1024 * 1024
    if phys >= 96 * 1024 * 1024:          # v5e / v6e: 128 MiB VMEM per core
        return 24 * 1024 * 1024, 64 * 1024 * 1024
    return 14 * 1024 * 1024, 48 * 1024 * 1024   # v7x: 64 MiB physical VMEM


_TARGET_STEP_BYTES, _VMEM_LIMIT_BYTES = _vmem_budget()

# Max input-H for the flattened (lane-dense) H+W kernel; the in-register build
# emits ~2*H concatenated pieces, keep the IR bounded.
_MAX_FLAT_H = 64


def _round_up(x, m):
    return -(-x // m) * m


def _sublane_multiple(dtype):
    # f32 -> 8, bf16 -> 16, int8/fp8 -> 32 (sub-32-bit dtypes pack sublanes).
    itemsize = jnp.dtype(dtype).itemsize
    return max(8, 8 * (4 // max(1, itemsize)))


def _choose_row_tile(rows, in_last, out_last, dtype):
    """Rows-per-block for 2-D (rows, last) blocks, sized by the *padded*
    (sublane x 128-lane) VMEM footprint of the input + output blocks."""
    it = jnp.dtype(dtype).itemsize
    align = _sublane_multiple(dtype)
    per_row = (_round_up(in_last, 128) + _round_up(out_last, 128)) * it
    tile = max(align, (_TARGET_STEP_BYTES // max(1, per_row)) // align * align)
    if rows > align:
        # Keep at least 2 grid steps so both v7x TensorCores get work.
        tile = min(tile, _round_up(pl.cdiv(rows, 2), align))
    return int(max(1, min(tile, rows)))


def _choose_batch_tile(batch, per_item_bytes):
    tile = max(1, _TARGET_STEP_BYTES // max(1, per_item_bytes))
    if batch > 1:
        tile = min(tile, pl.cdiv(batch, 2))   # >= 2 grid steps when possible
    return int(max(1, min(tile, batch)))


def _compiler_params(num_grid_dims):
    return pltpu.CompilerParams(
        dimension_semantics=("parallel",) * num_grid_dims,
        vmem_limit_bytes=_VMEM_LIMIT_BYTES,
    )


# --------------------------------------------------------------------------- #
# Kernels (each builds the padded block in-register and does ONE dense store)
# --------------------------------------------------------------------------- #
def _pad_rows_kernel(x_ref, o_ref, *, w_l, w_r, value):
    """(rows, W) block -> (rows, W + w_l + w_r) block, one full-width store."""
    r, _ = x_ref.shape
    pieces = []
    if w_l > 0:
        pieces.append(jnp.full((r, w_l), value, dtype=o_ref.dtype))
    pieces.append(x_ref[...])
    if w_r > 0:
        pieces.append(jnp.full((r, w_r), value, dtype=o_ref.dtype))
    o_ref[...] = jnp.concatenate(pieces, axis=-1) if len(pieces) > 1 else pieces[0]


def _pad_hw_flat_kernel(x_ref, o_ref, *, h_in, w_in, h_t, h_b, w_l, w_r, value):
    """Lane-dense H+W pad on flattened images.

    x: (b, h_in*w_in)  ->  o: (b, h_out*w_out); every DMA is contiguous and the
    single store is a full-lane-width store (key for w_out < 128)."""
    b = x_ref.shape[0]
    w_out = w_l + w_in + w_r
    x = x_ref[...]
    lead_pad = h_t * w_out + w_l           # top rows + left pad of first row
    mid_pad = w_r + w_l                    # right pad of row r + left of r+1
    tail_pad = w_r + h_b * w_out           # right pad of last row + bottom rows
    pieces = []
    if lead_pad > 0:
        pieces.append(jnp.full((b, lead_pad), value, dtype=o_ref.dtype))
    for r in range(h_in):
        pieces.append(x[:, r * w_in:(r + 1) * w_in])
        if r + 1 < h_in:
            if mid_pad > 0:
                pieces.append(jnp.full((b, mid_pad), value, dtype=o_ref.dtype))
        elif tail_pad > 0:
            pieces.append(jnp.full((b, tail_pad), value, dtype=o_ref.dtype))
    o_ref[...] = jnp.concatenate(pieces, axis=-1) if len(pieces) > 1 else pieces[0]


def _pad_hw3d_kernel(x_ref, o_ref, *, h_t, h_b, w_l, w_r, value):
    """(b, h_in, w_in) block -> (b, h_out, w_out) block, one dense store.

    Also used with w_l == w_r == 0 for H-only padding with a W-chunked grid."""
    b, h, w = x_ref.shape
    w_out = w_l + w + w_r
    x = x_ref[...]
    if w_l > 0 or w_r > 0:
        wp = []
        if w_l > 0:
            wp.append(jnp.full((b, h, w_l), value, dtype=o_ref.dtype))
        wp.append(x)
        if w_r > 0:
            wp.append(jnp.full((b, h, w_r), value, dtype=o_ref.dtype))
        x = jnp.concatenate(wp, axis=2)
    if h_t > 0 or h_b > 0:
        hp = []
        if h_t > 0:
            hp.append(jnp.full((b, h_t, w_out), value, dtype=o_ref.dtype))
        hp.append(x)
        if h_b > 0:
            hp.append(jnp.full((b, h_b, w_out), value, dtype=o_ref.dtype))
        x = jnp.concatenate(hp, axis=1)
    o_ref[...] = x


# --------------------------------------------------------------------------- #
# pallas_call wrappers
# --------------------------------------------------------------------------- #
def _pallas_pad_rows(x2, w_l, w_r, value):
    rows, w_in = x2.shape
    w_out = w_in + w_l + w_r
    r_tile = _choose_row_tile(rows, w_in, w_out, x2.dtype)
    kernel = functools.partial(_pad_rows_kernel, w_l=w_l, w_r=w_r, value=value)
    return pl.pallas_call(
        kernel,
        out_shape=jax.ShapeDtypeStruct((rows, w_out), x2.dtype),
        grid_spec=pltpu.PrefetchScalarGridSpec(
            num_scalar_prefetch=0,
            grid=(pl.cdiv(rows, r_tile),),
            in_specs=[pl.BlockSpec((r_tile, w_in), lambda i: (i, 0))],
            out_specs=pl.BlockSpec((r_tile, w_out), lambda i: (i, 0)),
        ),
        compiler_params=_compiler_params(1),
    )(x2)


def _pallas_pad_hw_flat(x3, h_t, h_b, w_l, w_r, value):
    batch, h_in, w_in = x3.shape
    h_out = h_in + h_t + h_b
    w_out = w_in + w_l + w_r
    in_last = h_in * w_in
    out_last = h_out * w_out
    x2 = x3.reshape(batch, in_last)          # contiguous metadata reshape
    b_tile = _choose_row_tile(batch, in_last, out_last, x3.dtype)
    kernel = functools.partial(_pad_hw_flat_kernel, h_in=h_in, w_in=w_in,
                               h_t=h_t, h_b=h_b, w_l=w_l, w_r=w_r, value=value)
    out2 = pl.pallas_call(
        kernel,
        out_shape=jax.ShapeDtypeStruct((batch, out_last), x3.dtype),
        grid_spec=pltpu.PrefetchScalarGridSpec(
            num_scalar_prefetch=0,
            grid=(pl.cdiv(batch, b_tile),),
            in_specs=[pl.BlockSpec((b_tile, in_last), lambda i: (i, 0))],
            out_specs=pl.BlockSpec((b_tile, out_last), lambda i: (i, 0)),
        ),
        compiler_params=_compiler_params(1),
    )(x2)
    return out2.reshape(batch, h_out, w_out)


def _pallas_pad_hw3d(x3, h_t, h_b, w_l, w_r, value):
    """One whole (padded) image per block; grid over the batch only."""
    batch, h_in, w_in = x3.shape
    h_out, w_out = h_in + h_t + h_b, w_in + w_l + w_r
    it = jnp.dtype(x3.dtype).itemsize
    align = _sublane_multiple(x3.dtype)
    per_img = (_round_up(h_in, align) * _round_up(w_in, 128)
               + _round_up(h_out, align) * _round_up(w_out, 128)) * it
    b_tile = _choose_batch_tile(batch, per_img)
    kernel = functools.partial(_pad_hw3d_kernel, h_t=h_t, h_b=h_b,
                               w_l=w_l, w_r=w_r, value=value)
    return pl.pallas_call(
        kernel,
        out_shape=jax.ShapeDtypeStruct((batch, h_out, w_out), x3.dtype),
        grid_spec=pltpu.PrefetchScalarGridSpec(
            num_scalar_prefetch=0,
            grid=(pl.cdiv(batch, b_tile),),
            in_specs=[pl.BlockSpec((b_tile, h_in, w_in), lambda i: (i, 0, 0))],
            out_specs=pl.BlockSpec((b_tile, h_out, w_out), lambda i: (i, 0, 0)),
        ),
        compiler_params=_compiler_params(1),
    )(x3)


def _pallas_pad_h3d(x3, h_t, h_b, value):
    """H-only padding; last dim untouched so it can be tiled in 128-lane chunks
    (also used as pass 2 of the huge-image fallback)."""
    batch, h_in, w = x3.shape
    h_out = h_in + h_t + h_b
    it = jnp.dtype(x3.dtype).itemsize
    align = _sublane_multiple(x3.dtype)
    rows_bytes = (_round_up(h_in, align) + _round_up(h_out, align)) * it
    per_img = rows_bytes * _round_up(w, 128)
    if per_img <= _TARGET_STEP_BYTES:
        w_chunk = w
        b_tile = _choose_batch_tile(batch, per_img)
    else:
        b_tile = 1
        w_chunk = max(128, (_TARGET_STEP_BYTES // max(1, rows_bytes * 128)) * 128)
        if w_chunk >= w:
            w_chunk = w
    kernel = functools.partial(_pad_hw3d_kernel, h_t=h_t, h_b=h_b,
                               w_l=0, w_r=0, value=value)
    return pl.pallas_call(
        kernel,
        out_shape=jax.ShapeDtypeStruct((batch, h_out, w), x3.dtype),
        grid_spec=pltpu.PrefetchScalarGridSpec(
            num_scalar_prefetch=0,
            grid=(pl.cdiv(batch, b_tile), pl.cdiv(w, w_chunk)),
            in_specs=[pl.BlockSpec((b_tile, h_in, w_chunk), lambda i, j: (i, 0, j))],
            out_specs=pl.BlockSpec((b_tile, h_out, w_chunk), lambda i, j: (i, 0, j)),
        ),
        compiler_params=_compiler_params(2),
    )(x3)


# --------------------------------------------------------------------------- #
# Public entry point
# --------------------------------------------------------------------------- #
def pallas_constant_pad(x, pad, value=0.0, mode="constant"):
    """Constant padding (torch F.pad semantics) with the hot loop in Pallas."""
    if mode != "constant":
        # TODO(synk): reflect / replicate / circular modes not implemented.
        raise NotImplementedError("only constant padding is implemented")

    if pad is None:
        pad = (0, 0, 0, 0)
    pad = tuple(int(p) for p in pad)
    if len(pad) == 2:
        w_l, w_r = pad
        h_t = h_b = 0
    elif len(pad) == 4:
        w_l, w_r, h_t, h_b = pad
    else:
        raise NotImplementedError("only pad tuples of length 2 or 4 are supported")

    x = jnp.asarray(x)
    if x.ndim < 1:
        raise ValueError("input must have rank >= 1")
    if len(pad) == 4 and x.ndim < 2:
        raise ValueError("a length-4 pad requires an input with rank >= 2")

    # Negative pads crop (torch semantics): do the crop with cheap XLA slicing
    # so the kernels only ever see non-negative constant padding.
    if min(w_l, w_r, h_t, h_b) < 0:
        w_dim = x.shape[-1]
        x = x[..., max(0, -w_l): w_dim - max(0, -w_r)]
        if x.ndim >= 2 and (h_t < 0 or h_b < 0):
            h_dim = x.shape[-2]
            x = x[..., max(0, -h_t): h_dim - max(0, -h_b), :]
        w_l, w_r, h_t, h_b = max(0, w_l), max(0, w_r), max(0, h_t), max(0, h_b)

    if w_l == 0 and w_r == 0 and h_t == 0 and h_b == 0:
        return x                       # no-op: skip the HBM read+write pass

    if x.size == 0:                    # degenerate empty input
        shp = list(x.shape)
        shp[-1] += w_l + w_r
        if x.ndim >= 2:
            shp[-2] += h_t + h_b
        return jnp.full(tuple(shp), value, dtype=x.dtype)

    w_in = x.shape[-1]
    w_out = w_in + w_l + w_r

    # ---- Width-only padding: lane-dense 2-D rows path ---------------------- #
    if h_t == 0 and h_b == 0:
        lead = x.shape[:-1]
        rows = int(math.prod(lead)) if lead else 1
        out2 = _pallas_pad_rows(x.reshape(rows, w_in), w_l, w_r, value)
        return out2.reshape(lead + (w_out,))

    # ---- Padding of the last two dims -------------------------------------- #
    h_in = x.shape[-2]
    h_out = h_in + h_t + h_b
    lead = x.shape[:-2]
    batch = int(math.prod(lead)) if lead else 1
    x3 = x.reshape(batch, h_in, w_in)

    if w_l == 0 and w_r == 0:
        out3 = _pallas_pad_h3d(x3, h_t, h_b, value)
    elif w_out < 128 and h_in <= _MAX_FLAT_H:
        # Small last dim: flattened lane-dense blocks (contiguous DMAs, one
        # unmasked full-width store per block) — biggest win for feature maps.
        out3 = _pallas_pad_hw_flat(x3, h_t, h_b, w_l, w_r, value)
    else:
        it = jnp.dtype(x3.dtype).itemsize
        align = _sublane_multiple(x3.dtype)
        per_img = (_round_up(h_in, align) * _round_up(w_in, 128)
                   + _round_up(h_out, align) * _round_up(w_out, 128)) * it
        if per_img <= _TARGET_STEP_BYTES:
            out3 = _pallas_pad_hw3d(x3, h_t, h_b, w_l, w_r, value)
        else:
            # Image too large for one block on any generation: two lane-dense
            # passes (W pad over rows, then H pad with the last dim tiled).
            y2 = _pallas_pad_rows(x3.reshape(batch * h_in, w_in), w_l, w_r, value)
            out3 = _pallas_pad_h3d(y2.reshape(batch, h_in, w_out), h_t, h_b, value)
    return out3.reshape(lead + (h_out, w_out))


class Pad:
    """JAX/Pallas mirror of the PyTorch `Pad` nn.Module (constant mode)."""

    def __init__(self, pad, mode="constant", value=0.0):
        self.pad = pad if pad is not None else (0, 0, 0, 0)
        self.mode = mode
        self.value = value
        if self.mode != "constant":
            # TODO(synk): reflect / replicate / circular modes not implemented.
            raise NotImplementedError("only constant padding is implemented")

    def __call__(self, x):
        return pallas_constant_pad(x, self.pad, self.value, mode=self.mode)


if __name__ == "__main__":
    key = jax.random.PRNGKey(0)
    x = jax.random.normal(key, (2, 4, 16, 16), dtype=jnp.float32)

    # 1) H+W padding, small W -> flattened lane-dense path.
    pad = (1, 2, 3, 4)
    value = 0.5
    out = jax.block_until_ready(Pad(pad, mode="constant", value=value)(x))
    ref = jnp.pad(x, ((0, 0), (0, 0), (pad[2], pad[3]), (pad[0], pad[1])),
                  mode="constant", constant_values=value)
    assert out.shape == ref.shape and jnp.allclose(out, ref), "mismatch (H+W pad)"

    # 2) Width-only padding (lane-dense 2-D rows path).
    out2 = jax.block_until_ready(Pad((3, 1), value=-1.0)(x))
    ref2 = jnp.pad(x, ((0, 0), (0, 0), (0, 0), (3, 1)), constant_values=-1.0)
    assert out2.shape == ref2.shape and jnp.allclose(out2, ref2), "mismatch (W-only pad)"

    # 3) Negative pads crop (torch semantics).
    out3 = jax.block_until_ready(Pad((-2, 1, 0, -3), value=value)(x))
    ref3 = jnp.pad(x[:, :, 0:13, 2:16], ((0, 0), (0, 0), (0, 0), (0, 1)),
                   constant_values=value)
    assert out3.shape == ref3.shape and jnp.allclose(out3, ref3), "mismatch (negative pad)"

    # 4) All-zero pad: no-op fast return.
    out4 = Pad((0, 0, 0, 0))(x)
    assert out4.shape == x.shape and jnp.allclose(out4, x), "mismatch (zero pad)"

    # 5) H-only padding (W-chunkable path), bf16 to exercise dtype-aware tiling.
    xb = x.astype(jnp.bfloat16)
    out5 = jax.block_until_ready(Pad((0, 0, 2, 1), value=0.25)(xb))
    ref5 = jnp.pad(xb, ((0, 0), (0, 0), (2, 1), (0, 0)), constant_values=0.25)
    assert out5.shape == ref5.shape and jnp.allclose(
        out5.astype(jnp.float32), ref5.astype(jnp.float32)), "mismatch (H-only pad)"

    # 6) H+W padding with a lane-dense last dim (3-D single-pass path).
    xw = jax.random.normal(jax.random.PRNGKey(1), (2, 2, 8, 128), dtype=jnp.float32)
    out6 = jax.block_until_ready(Pad((1, 2, 3, 4), value=-0.5)(xw))
    ref6 = jnp.pad(xw, ((0, 0), (0, 0), (3, 4), (1, 2)), constant_values=-0.5)
    assert out6.shape == ref6.shape and jnp.allclose(out6, ref6), "mismatch (wide H+W pad)"

    print("KERNEL_OK")
</pallas_src>

<mosaic_0001>
module attributes {stable_mosaic.version = 11 : i64} {
  func.func @_pad_hw_flat_kernel(%arg0: i32, %arg1: memref<8x256xf32, #tpu.memory_space<vmem>>, %arg2: memref<8x437xf32, #tpu.memory_space<vmem>>) attributes {dimension_semantics = [#tpu.dimension_semantics<parallel>], iteration_bounds = array<i64: 1>, scalar_prefetch = 0 : i64, scratch_operands = 0 : i64, tpu.core_type = #tpu.core_type<tc>, window_params = [{transform_indices = @transform_0, window_bounds = array<i64: 8, 256>}, {transform_indices = @transform_1, window_bounds = array<i64: 8, 437>}]} {
    %c0 = arith.constant 0 : index
    %c0_0 = arith.constant 0 : index
    %0 = vector.load %arg1[%c0, %c0_0] : memref<8x256xf32, #tpu.memory_space<vmem>>, vector<8x256xf32>
    %cst = arith.constant 5.000000e-01 : f32
    %1 = vector.broadcast %cst : f32 to vector<8x58xf32>
    %2 = vector.extract_strided_slice %0 {offsets = [0, 0], sizes = [8, 16], strides = [1, 1]} : vector<8x256xf32> to vector<8x16xf32>
    %cst_1 = arith.constant 5.000000e-01 : f32
    %3 = vector.broadcast %cst_1 : f32 to vector<8x3xf32>
    %4 = vector.extract_strided_slice %0 {offsets = [0, 16], sizes = [8, 16], strides = [1, 1]} : vector<8x256xf32> to vector<8x16xf32>
    %cst_2 = arith.constant 5.000000e-01 : f32
    %5 = vector.broadcast %cst_2 : f32 to vector<8x3xf32>
    %6 = vector.extract_strided_slice %0 {offsets = [0, 32], sizes = [8, 16], strides = [1, 1]} : vector<8x256xf32> to vector<8x16xf32>
    %cst_3 = arith.constant 5.000000e-01 : f32
    %7 = vector.broadcast %cst_3 : f32 to vector<8x3xf32>
    %8 = vector.extract_strided_slice %0 {offsets = [0, 48], sizes = [8, 16], strides = [1, 1]} : vector<8x256xf32> to vector<8x16xf32>
    %cst_4 = arith.constant 5.000000e-01 : f32
    %9 = vector.broadcast %cst_4 : f32 to vector<8x3xf32>
    %10 = vector.extract_strided_slice %0 {offsets = [0, 64], sizes = [8, 16], strides = [1, 1]} : vector<8x256xf32> to vector<8x16xf32>
    %cst_5 = arith.constant 5.000000e-01 : f32
    %11 = vector.broadcast %cst_5 : f32 to vector<8x3xf32>
    %12 = vector.extract_strided_slice %0 {offsets = [0, 80], sizes = [8, 16], strides = [1, 1]} : vector<8x256xf32> to vector<8x16xf32>
    %cst_6 = arith.constant 5.000000e-01 : f32
    %13 = vector.broadcast %cst_6 : f32 to vector<8x3xf32>
    %14 = vector.extract_strided_slice %0 {offsets = [0, 96], sizes = [8, 16], strides = [1, 1]} : vector<8x256xf32> to vector<8x16xf32>
    %cst_7 = arith.constant 5.000000e-01 : f32
    %15 = vector.broadcast %cst_7 : f32 to vector<8x3xf32>
    %16 = vector.extract_strided_slice %0 {offsets = [0, 112], sizes = [8, 16], strides = [1, 1]} : vector<8x256xf32> to vector<8x16xf32>
    %cst_8 = arith.constant 5.000000e-01 : f32
    %17 = vector.broadcast %cst_8 : f32 to vector<8x3xf32>
    %18 = vector.extract_strided_slice %0 {offsets = [0, 128], sizes = [8, 16], strides = [1, 1]} : vector<8x256xf32> to vector<8x16xf32>
    %cst_9 = arith.constant 5.000000e-01 : f32
    %19 = vector.broadcast %cst_9 : f32 to vector<8x3xf32>
    %20 = vector.extract_strided_slice %0 {offsets = [0, 144], sizes = [8, 16], strides = [1, 1]} : vector<8x256xf32> to vector<8x16xf32>
    %cst_10 = arith.constant 5.000000e-01 : f32
    %21 = vector.broadcast %cst_10 : f32 to vector<8x3xf32>
    %22 = vector.extract_strided_slice %0 {offsets = [0, 160], sizes = [8, 16], strides = [1, 1]} : vector<8x256xf32> to vector<8x16xf32>
    %cst_11 = arith.constant 5.000000e-01 : f32
    %23 = vector.broadcast %cst_11 : f32 to vector<8x3xf32>
    %24 = vector.extract_strided_slice %0 {offsets = [0, 176], sizes = [8, 16], strides = [1, 1]} : vector<8x256xf32> to vector<8x16xf32>
    %cst_12 = arith.constant 5.000000e-01 : f32
    %25 = vector.broadcast %cst_12 : f32 to vector<8x3xf32>
    %26 = vector.extract_strided_slice %0 {offsets = [0, 192], sizes = [8, 16], strides = [1, 1]} : vector<8x256xf32> to vector<8x16xf32>
    %cst_13 = arith.constant 5.000000e-01 : f32
    %27 = vector.broadcast %cst_13 : f32 to vector<8x3xf32>
    %28 = vector.extract_strided_slice %0 {offsets = [0, 208], sizes = [8, 16], strides = [1, 1]} : vector<8x256xf32> to vector<8x16xf32>
    %cst_14 = arith.constant 5.000000e-01 : f32
    %29 = vector.broadcast %cst_14 : f32 to vector<8x3xf32>
    %30 = vector.extract_strided_slice %0 {offsets = [0, 224], sizes = [8, 16], strides = [1, 1]} : vector<8x256xf32> to vector<8x16xf32>
    %cst_15 = arith.constant 5.000000e-01 : f32
    %31 = vector.broadcast %cst_15 : f32 to vector<8x3xf32>
    %32 = vector.extract_strided_slice %0 {offsets = [0, 240], sizes = [8, 16], strides = [1, 1]} : vector<8x256xf32> to vector<8x16xf32>
    %cst_16 = arith.constant 5.000000e-01 : f32
    %33 = vector.broadcast %cst_16 : f32 to vector<8x78xf32>
    %34 = tpu.concatenate %1, %2, %3, %4, %5, %6, %7, %8, %9, %10, %11, %12, %13, %14, %15, %16 in 1 : vector<8x58xf32>, vector<8x16xf32>, vector<8x3xf32>, vector<8x16xf32>, vector<8x3xf32>, vector<8x16xf32>, vector<8x3xf32>, vector<8x16xf32>, vector<8x3xf32>, vector<8x16xf32>, vector<8x3xf32>, vector<8x16xf32>, vector<8x3xf32>, vector<8x16xf32>, vector<8x3xf32>, vector<8x16xf32> -> vector<8x207xf32>
    %35 = tpu.concatenate %17, %18, %19, %20, %21, %22, %23, %24, %25, %26, %27, %28, %29, %30, %31, %32 in 1 : vector<8x3xf32>, vector<8x16xf32>, vector<8x3xf32>, vector<8x16xf32>, vector<8x3xf32>, vector<8x16xf32>, vector<8x3xf32>, vector<8x16xf32>, vector<8x3xf32>, vector<8x16xf32>, vector<8x3xf32>, vector<8x16xf32>, vector<8x3xf32>, vector<8x16xf32>, vector<8x3xf32>, vector<8x16xf32> -> vector<8x152xf32>
    %36 = tpu.concatenate %34, %35, %33 in 1 : vector<8x207xf32>, vector<8x152xf32>, vector<8x78xf32> -> vector<8x437xf32>
    %c0_17 = arith.constant 0 : index
    %c0_18 = arith.constant 0 : index
    %37 = vector.load %arg2[%c0_17, %c0_18] : memref<8x437xf32, #tpu.memory_space<vmem>>, vector<8x437xf32>
    tpu.vector_store %arg2[%c0_17, %c0_18], %36 {strides = array<i32>} : memref<8x437xf32, #tpu.memory_space<vmem>>, vector<8x437xf32>,
    return
  }
  func.func @transform_0(%arg0: i32) -> (i32, i32) {
    %c0_i32 = arith.constant 0 : i32
    %c0_i32_0 = arith.constant 0 : i32
    return %arg0, %c0_i32 : i32, i32
  }
  func.func @transform_1(%arg0: i32) -> (i32, i32) {
    %c0_i32 = arith.constant 0 : i32
    %c0_i32_0 = arith.constant 0 : i32
    return %arg0, %c0_i32 : i32, i32
  }
}

</mosaic_0001>

<llo_original>
// kernel: tpu_custom_call.1
$region0: #{tpu_custom_call.1}
  #allocation0 [shape = 'u32[]', space=smem, size = 0x4, offset = 0x4, fixed_abs, tag = 'smem constant byte address 0x4 - core index']
  #allocation1 [shape = 'u32[144,128]{1,0:T(1,128)}', space=vmem, size = 0x12000, scoped, tag = 'internal scratch']
  %s0 = inlined_call_operand.hbm [shape: f32[8,256], index: 0, kind: input, shape index: {}]
  %s1 = inlined_call_operand.hbm [shape: f32[8,437], index: 1, kind: output, shape index: {}]
  %s2 = sld [smem:[#allocation0]]
  $region18: #{tpu_custom_call.1} parent=0
    _
  %s4 = ssub.s32 1, %s2
  %s5 = scalar_select 0, %s4, %s2
  $region1: #{tpu_custom_call.1} parent=0
    #allocation2 [shape = 'u8[8192]{0}', space=vmem, size = 0x2000, scoped, tag = 'input window, operand 0, single buffered']
    #allocation3 [shape = 's32[1]{0}', space=sflag, size = 0x4, scoped, tag = 'scoped memory for tpu_custom_call.1']
    #allocation4 [shape = 's32[1]{0}', space=sflag, size = 0x4, scoped, tag = 'scoped memory for tpu_custom_call.1']
    #allocation5 [shape = 'u8[16384]{0}', space=vmem, size = 0x4000, scoped, tag = 'output window, operand 0, single buffered']
    %6 = vsyncpa [#allocation3], 0
    %7 = vsyncpa [#allocation4], 0
    // Predicated region
    $region2: #{tpu_custom_call.1} parent=1 // pred_check
      _
    $region3: #{tpu_custom_call.1} parent=1 // pred_check_branch
      %9 = sbr.rel (0) target = $region5
    $region4: #{tpu_custom_call.1} parent=1 // pred_region
      %s11 = ssub.s32 256, 256
      %12 = vsyncadd [#allocation3], %s11
      %s14 = sshll.u32 [#allocation2], 4
      %s15 = int_to_ptr.vmem [resolvable:$true] %s14
      %17 = dma.hbm_to_vmem [thread:$0]  %s0, 256, %s15, [#allocation3]
    $region5: #{tpu_custom_call.1} parent=1 // pred_fallthru
      _
    // Predicated region
    $region6: #{tpu_custom_call.1} parent=1 // pred_check
      _
    $region7: #{tpu_custom_call.1} parent=1 // pred_check_branch
      %19 = sbr.rel (0) target = $region9
    $region8: #{tpu_custom_call.1} parent=1 // pred_region
      %20 = dma.done [#allocation3], 256
    $region9: #{tpu_custom_call.1} parent=1 // pred_fallthru
      _
    %v21 = vld [vmem:[#allocation2] sm:$0xff]
    %v22 = vld [vmem:[#allocation2 + $0x8] sm:$0xff]
    %24 = vrot.lane.b32.xlu0 %v21, 58
    %v25 = vpop.permute.xlu0 %24
    %27 = vrot.lane.b32.xlu0 %v21, 61
    %v28 = vpop.permute.xlu0 %27
    %30 = vrot.lane.b32.xlu0 %v21, 64
    %v31 = vpop.permute.xlu0 %30
    %33 = vrot.lane.b32.xlu0 %v21, 67
    %v34 = vpop.permute.xlu0 %33
    %36 = vrot.lane.b32.xlu0 %v21, 70
    %v37 = vpop.permute.xlu0 %36
    %39 = vrot.lane.b32.xlu0 %v21, 73
    %v40 = vpop.permute.xlu0 %39
    %42 = vrot.lane.b32.xlu0 %v21, 76
    %v43 = vpop.permute.xlu0 %42
    %45 = vrot.lane.b32.xlu0 %v21, 79
    %v46 = vpop.permute.xlu0 %45
    %vm48 = vcmask 474112
    %v49 = vsel %vm48, 0.5, %v25
    %vm50 = vcmask 605184
    %v51 = vsel %vm50, %v49, 0.5
    %vm52 = vcmask 629760
    %v53 = vsel %vm52, %v51, %v28
    %vm54 = vcmask 760832
    %v55 = vsel %vm54, %v53, 0.5
    %vm56 = vcmask 785408
    %v57 = vsel %vm56, %v55, %v31
    %vm58 = vcmask 916480
    %v59 = vsel %vm58, %v57, 0.5
    %vm60 = vcmask 941056
    %v61 = vsel %vm60, %v59, %v34
    %vm62 = vcmask 23552
    %v63 = vsel %vm62, %v34, 0.5
    %vm64 = vcmask 48128
    %v65 = vsel %vm64, %v63, %v37
    %vm66 = vcmask 179200
    %v67 = vsel %vm66, %v65, 0.5
    %vm68 = vcmask 203776
    %v69 = vsel %vm68, %v67, %v40
    %vm70 = vcmask 334848
    %v71 = vsel %vm70, %v69, 0.5
    %vm72 = vcmask 359424
    %v73 = vsel %vm72, %v71, %v43
    %vm74 = vcmask 490496
    %v75 = vsel %vm74, %v73, 0.5
    %vm76 = vcmask 515072
    %v77 = vsel %vm76, %v75, %v46
    %79 = vrot.lane.b32.xlu0 %v22, 3
    %v80 = vpop.permute.xlu0 %79
    %82 = vrot.lane.b32.xlu0 %v22, 6
    %v83 = vpop.permute.xlu0 %82
    %85 = vrot.lane.b32.xlu0 %v22, 9
    %v86 = vpop.permute.xlu0 %85
    %88 = vrot.lane.b32.xlu0 %v22, 12
    %v89 = vpop.permute.xlu0 %88
    %91 = vrot.lane.b32.xlu0 %v22, 15
    %v92 = vpop.permute.xlu0 %91
    %94 = vrot.lane.b32.xlu0 %v22, 18
    %v95 = vpop.permute.xlu0 %94
    %97 = vrot.lane.b32.xlu0 %v22, 21
    %v98 = vpop.permute.xlu0 %97
    %100 = vrot.lane.b32.xlu0 %v22, 24
    %v101 = vpop.permute.xlu0 %100
    %v103 = vsel %vm62, 0.5, %v80
    %vm104 = vcmask 154624
    %v105 = vsel %vm104, %v103, 0.5
    %v106 = vsel %vm66, %v105, %v83
    %vm107 = vcmask 310272
    %v108 = vsel %vm107, %v106, 0.5
    %v109 = vsel %vm70, %v108, %v86
    %vm110 = vcmask 465920
    %v111 = vsel %vm110, %v109, 0.5
    %v112 = vsel %vm74, %v111, %v89
    %vm113 = vcmask 621568
    %v114 = vsel %vm113, %v112, 0.5
    %vm115 = vcmask 646144
    %v116 = vsel %vm115, %v114, %v92
    %vm117 = vcmask 777216
    %v118 = vsel %vm117, %v116, 0.5
    %vm119 = vcmask 801792
    %v120 = vsel %vm119, %v118, %v95
    %vm121 = vcmask 932864
    %v122 = vsel %vm121, %v120, 0.5
    %vm123 = vcmask 957440
    %v124 = vsel %vm123, %v122, %v98
    %vm125 = vcmask 39936
    %v126 = vsel %vm125, %v98, 0.5
    %vm127 = vcmask 64512
    %v128 = vsel %vm127, %v126, %v101
    %131 = vrot.lane.b32.xlu0 %v124, 79
    %v132 = vpop.permute.xlu0 %131
    %133 = vrot.lane.b32.xlu0 %v128, 79
    %v134 = vpop.permute.xlu0 %133
    %v135 = vsel %vm115, %v132, %v134
    %v138 = vsel %vm115, %v77, %v132
    %vm139 = vcmask 842752
    %v140 = vsel %vm139, %v135, 0.5
    %141 = vst [vmem:[#allocation5] sm:$0xff] %v61
    %142 = vst [vmem:[#allocation5 + $0x8] sm:$0xff] %v138
    %143 = vst [vmem:[#allocation5 + $0x10] sm:$0xff] %v140
    %vm144 = vcmask 433152
    %145 = vst.msk [vmem:[#allocation5 + $0x18] sm:$0xff] %vm144, 0.5
    // Predicated region
    $region10: #{tpu_custom_call.1} parent=1 // pred_check
      _
    $region11: #{tpu_custom_call.1} parent=1 // pred_check_branch
      %147 = sbr.rel (0) target = $region13
    $region12: #{tpu_custom_call.1} parent=1 // pred_region
      %s149 = ssub.s32 512, 512
      %150 = vsyncadd [#allocation4], %s149
      %s152 = sshll.u32 [#allocation5], 4
      %s153 = int_to_ptr.vmem [resolvable:$true] %s152
      %155 = dma.vmem_to_hbm [thread:$0]  %s153, 512, %s1, [#allocation4]
    $region13: #{tpu_custom_call.1} parent=1 // pred_fallthru
      _
    // Predicated region
    $region14: #{tpu_custom_call.1} parent=1 // pred_check
      _
    $region15: #{tpu_custom_call.1} parent=1 // pred_check_branch
      %157 = sbr.rel (0) target = $region17
    $region16: #{tpu_custom_call.1} parent=1 // pred_region
      %158 = dma.done [#allocation4], 512
    $region17: #{tpu_custom_call.1} parent=1 // pred_fallthru
      _
    %159 = vsyncpa [#allocation3], 1
    %160 = vsyncpa [#allocation4], 1

</llo_original>
